<compile_context>
chip_gen: v6e
topology: v6e:2x2x1
jax: 0.10.0
libtpu: 0.0.40
codegen_flags: <defaults>
</compile_context>

<pallas_src>
import functools

import jax
import jax.numpy as jnp
from jax.experimental import pallas as pl
from jax.experimental.pallas import tpu as pltpu

HIDDEN = 128
LANES = 128
NEG_LARGE = -1e30


def _round_up(x, m):
    return (x + m - 1) // m * m


def nn_kernel(x_ref, w1_ref, b1_ref, wh_ref, bh_ref, policy_ref, value_ref, *,
              n_actions):
    # shared = ReLU(x @ W1 + b1)
    x = x_ref[...]
    h = jnp.dot(x, w1_ref[...], preferred_element_type=jnp.float32) + b1_ref[...]
    h = jnp.maximum(h, 0.0)

    # Fused heads: columns [0, n_actions) are policy logits, column n_actions is the
    # value, remaining lanes are zero padding (zero weights / zero bias).
    fused = jnp.dot(h, wh_ref[...], preferred_element_type=jnp.float32) + bh_ref[...]

    # Max-stabilized softmax restricted to the policy lanes.
    col = jax.lax.broadcasted_iota(jnp.int32, fused.shape, 1)
    is_policy = col < n_actions
    logits = jnp.where(is_policy, fused, NEG_LARGE)
    m = jnp.max(logits, axis=1, keepdims=True)
    # Non-policy lanes hold -1e30, so exp underflows to exactly 0 — no extra mask needed.
    e = jnp.exp(logits - m)
    denom = jnp.sum(e, axis=1, keepdims=True)
    probs = e * pl.reciprocal(denom, approx=False)  # exact: keeps 1e-5 tolerance

    policy_ref[...] = probs[:, :n_actions]
    value_ref[...] = fused[:, n_actions:n_actions + 1]


def fuse_head_params(params):
    """Build the fused kernel parameters ONCE (outside the per-call forward path)."""
    w1, b1, wp, bp, wv, bv = params
    n_actions = wp.shape[1]
    n_pad = _round_up(n_actions + 1, LANES)
    wh = (jnp.zeros((HIDDEN, n_pad), jnp.float32)
          .at[:, :n_actions].set(wp)
          .at[:, n_actions:n_actions + 1].set(wv))
    bh = (jnp.zeros((1, n_pad), jnp.float32)
          .at[:, :n_actions].set(bp)
          .at[:, n_actions:n_actions + 1].set(bv))
    return (w1, b1, wh, bh, n_actions)


def nn_forward(x, fused_params, *, tile_b=4096):
    """x: (B, input_size) f32. Returns (policy (B, n_actions), value (B, 1))."""
    w1, b1, wh, bh, n_actions = fused_params
    B, input_size = x.shape
    n_pad = wh.shape[1]

    # Sublane-aligned batch tile; cap so the batch grid keeps >= 2 steps when it can
    # (v7x: two TensorCores shard the "parallel" axis only if it has >= 2 iterations).
    tile_b = min(tile_b, _round_up(pl.cdiv(B, 2), 8))
    grid_b = pl.cdiv(B, tile_b)  # ragged last block is masked by Pallas; no jnp.pad

    kernel = functools.partial(nn_kernel, n_actions=n_actions)
    policy, value = pl.pallas_call(
        kernel,
        out_shape=(
            jax.ShapeDtypeStruct((B, n_actions), jnp.float32),
            jax.ShapeDtypeStruct((B, 1), jnp.float32),
        ),
        grid=(grid_b,),
        in_specs=[
            pl.BlockSpec((tile_b, input_size), lambda i: (i, 0)),   # x tile
            pl.BlockSpec((input_size, HIDDEN), lambda i: (0, 0)),   # W1 (broadcast)
            pl.BlockSpec((1, HIDDEN), lambda i: (0, 0)),            # b1
            pl.BlockSpec((HIDDEN, n_pad), lambda i: (0, 0)),        # fused head W
            pl.BlockSpec((1, n_pad), lambda i: (0, 0)),             # fused head b
        ],
        out_specs=(
            pl.BlockSpec((tile_b, n_actions), lambda i: (i, 0)),    # policy, no slice
            pl.BlockSpec((tile_b, 1), lambda i: (i, 0)),            # value, no slice
        ),
        compiler_params=pltpu.CompilerParams(
            dimension_semantics=("parallel",),  # v7x: shard batch across 2 TCs
        ),
    )(x, w1, b1, wh, bh)
    return policy, value


def init_params(key, input_size, n_actions):
    """Deterministic init mimicking PyTorch Linear's U(-1/sqrt(fan_in), 1/sqrt(fan_in))."""
    ks = jax.random.split(key, 6)

    def lin(kw, kb, fan_in, fan_out):
        bound = 1.0 / jnp.sqrt(float(fan_in))
        w = jax.random.uniform(kw, (fan_in, fan_out), jnp.float32, -bound, bound)
        b = jax.random.uniform(kb, (1, fan_out), jnp.float32, -bound, bound)
        return w, b

    w1, b1 = lin(ks[0], ks[1], input_size, HIDDEN)
    wp, bp = lin(ks[2], ks[3], HIDDEN, n_actions)
    wv, bv = lin(ks[4], ks[5], HIDDEN, 1)
    return (w1, b1, wp, bp, wv, bv)


def reference_forward(x, params):
    w1, b1, wp, bp, wv, bv = params
    h = jnp.maximum(x @ w1 + b1, 0.0)
    logits = h @ wp + bp
    policy = jax.nn.softmax(logits, axis=1)
    value = h @ wv + bv
    return policy, value


if __name__ == "__main__":
    key = jax.random.PRNGKey(0)
    k_x, k_p, k_x2 = jax.random.split(key, 3)

    batch = 2
    input_size = 16
    n_actions = 4

    x = jax.random.normal(k_x, (batch, input_size), dtype=jnp.float32)
    params = init_params(k_p, input_size, n_actions)
    fused_params = fuse_head_params(params)          # built once, reused per call
    fused_params = jax.block_until_ready(fused_params)

    policy, value = nn_forward(x, fused_params)
    jax.block_until_ready((policy, value))

    ref_policy, ref_value = reference_forward(x, params)
    assert policy.shape == (batch, n_actions)
    assert value.shape == (batch, 1)
    assert jnp.allclose(policy, ref_policy, atol=1e-5, rtol=1e-5)
    assert jnp.allclose(value, ref_value, atol=1e-5, rtol=1e-5)
    assert jnp.allclose(jnp.sum(policy, axis=1), 1.0, atol=1e-5)

    # Larger, non-tile-multiple batch: exercises the multi-step grid AND the
    # ragged (masked) last block with no jnp.pad.
    big_b = 1000
    x_big = jax.random.normal(k_x2, (big_b, input_size), dtype=jnp.float32)
    policy_b, value_b = nn_forward(x_big, fused_params)
    jax.block_until_ready((policy_b, value_b))
    ref_policy_b, ref_value_b = reference_forward(x_big, params)
    assert policy_b.shape == (big_b, n_actions)
    assert value_b.shape == (big_b, 1)
    assert jnp.allclose(policy_b, ref_policy_b, atol=1e-5, rtol=1e-5)
    assert jnp.allclose(value_b, ref_value_b, atol=1e-5, rtol=1e-5)
    assert jnp.allclose(jnp.sum(policy_b, axis=1), 1.0, atol=1e-5)

    print("KERNEL_OK")
</pallas_src>

<mosaic_0001>
module attributes {stable_mosaic.version = 11 : i64} {
  func.func @nn_kernel(%arg0: i32, %arg1: memref<8x16xf32, #tpu.memory_space<vmem>>, %arg2: memref<16x128xf32, #tpu.memory_space<vmem>>, %arg3: memref<1x128xf32, #tpu.memory_space<vmem>>, %arg4: memref<128x128xf32, #tpu.memory_space<vmem>>, %arg5: memref<1x128xf32, #tpu.memory_space<vmem>>, %arg6: memref<8x4xf32, #tpu.memory_space<vmem>>, %arg7: memref<8x1xf32, #tpu.memory_space<vmem>>) attributes {dimension_semantics = [#tpu.dimension_semantics<parallel>], iteration_bounds = array<i64: 1>, scalar_prefetch = 0 : i64, scratch_operands = 0 : i64, tpu.core_type = #tpu.core_type<tc>, window_params = [{transform_indices = @transform_0, window_bounds = array<i64: 8, 16>}, {pipeline_mode = #tpu.pipeline_mode<synchronous>, transform_indices = @transform_1, window_bounds = array<i64: 16, 128>}, {pipeline_mode = #tpu.pipeline_mode<synchronous>, transform_indices = @transform_2, window_bounds = array<i64: 1, 128>}, {pipeline_mode = #tpu.pipeline_mode<synchronous>, transform_indices = @transform_3, window_bounds = array<i64: 128, 128>}, {pipeline_mode = #tpu.pipeline_mode<synchronous>, transform_indices = @transform_4, window_bounds = array<i64: 1, 128>}, {transform_indices = @transform_5, window_bounds = array<i64: 8, 4>}, {transform_indices = @transform_6, window_bounds = array<i64: 8, 1>}]} {
    %c0 = arith.constant 0 : index
    %c0_0 = arith.constant 0 : index
    %0 = vector.load %arg1[%c0, %c0_0] : memref<8x16xf32, #tpu.memory_space<vmem>>, vector<8x16xf32>
    %c0_1 = arith.constant 0 : index
    %c0_2 = arith.constant 0 : index
    %1 = vector.load %arg2[%c0_1, %c0_2] : memref<16x128xf32, #tpu.memory_space<vmem>>, vector<16x128xf32>
    %cst = arith.constant dense<0.000000e+00> : vector<8x128xf32>
    %2 = tpu.matmul %0, %1, %cst {dimension_numbers = #tpu.dot_dimension_numbers<[1], [0], [0], [1], [0, 0, 1, 1], [], []>} : vector<8x16xf32>, vector<16x128xf32>, vector<8x128xf32> -> vector<8x128xf32>
    %c0_3 = arith.constant 0 : index
    %c0_4 = arith.constant 0 : index
    %3 = vector.load %arg3[%c0_3, %c0_4] : memref<1x128xf32, #tpu.memory_space<vmem>>, vector<1x128xf32>
    %4 = vector.broadcast %3 : vector<1x128xf32> to vector<8x128xf32>
    %5 = arith.addf %2, %4 : vector<8x128xf32>
    %cst_5 = arith.constant 0.000000e+00 : f32
    %6 = vector.broadcast %cst_5 : f32 to vector<8x128xf32>
    %7 = arith.maximumf %5, %6 : vector<8x128xf32>
    %c0_6 = arith.constant 0 : index
    %c0_7 = arith.constant 0 : index
    %8 = vector.load %arg4[%c0_6, %c0_7] : memref<128x128xf32, #tpu.memory_space<vmem>>, vector<128x128xf32>
    %cst_8 = arith.constant dense<0.000000e+00> : vector<8x128xf32>
    %9 = tpu.matmul %7, %8, %cst_8 {dimension_numbers = #tpu.dot_dimension_numbers<[1], [0], [0], [1], [0, 0, 1, 1], [], []>} : vector<8x128xf32>, vector<128x128xf32>, vector<8x128xf32> -> vector<8x128xf32>
    %c0_9 = arith.constant 0 : index
    %c0_10 = arith.constant 0 : index
    %10 = vector.load %arg5[%c0_9, %c0_10] : memref<1x128xf32, #tpu.memory_space<vmem>>, vector<1x128xf32>
    %11 = vector.broadcast %10 : vector<1x128xf32> to vector<8x128xf32>
    %12 = arith.addf %9, %11 : vector<8x128xf32>
    %13 = tpu.iota {dimensions = array<i32: 1>} : vector<8x128xi32>
    %c4_i32 = arith.constant 4 : i32
    %14 = vector.broadcast %c4_i32 : i32 to vector<8x128xi32>
    %15 = arith.cmpi slt, %13, %14 : vector<8x128xi32>
    %cst_11 = arith.constant -1.000000e+30 : f32
    %16 = vector.broadcast %cst_11 : f32 to vector<8x128xf32>
    %17 = arith.select %15, %12, %16 : vector<8x128xi1>, vector<8x128xf32>
    %cst_12 = arith.constant dense<0xFF800000> : vector<8xf32>
    %18 = vector.multi_reduction <maximumf>, %17, %cst_12 [1] : vector<8x128xf32> to vector<8xf32>
    %19 = vector.shape_cast %18 : vector<8xf32> to vector<8x1xf32>
    %20 = vector.broadcast %19 : vector<8x1xf32> to vector<8x128xf32>
    %21 = arith.subf %17, %20 : vector<8x128xf32>
    %22 = math.exp %21 : vector<8x128xf32>
    %cst_13 = arith.constant dense<0.000000e+00> : vector<8xf32>
    %23 = vector.multi_reduction <add>, %22, %cst_13 [1] : vector<8x128xf32> to vector<8xf32>
    %24 = vector.shape_cast %23 : vector<8xf32> to vector<8x1xf32>
    %25 = tpu.reciprocal %24 : vector<8x1xf32> -> vector<8x1xf32>
    %26 = vector.broadcast %25 : vector<8x1xf32> to vector<8x128xf32>
    %27 = arith.mulf %22, %26 : vector<8x128xf32>
    %28 = vector.extract_strided_slice %27 {offsets = [0, 0], sizes = [8, 4], strides = [1, 1]} : vector<8x128xf32> to vector<8x4xf32>
    %c0_14 = arith.constant 0 : index
    %c0_15 = arith.constant 0 : index
    %29 = vector.load %arg6[%c0_14, %c0_15] : memref<8x4xf32, #tpu.memory_space<vmem>>, vector<8x4xf32>
    tpu.vector_store %arg6[%c0_14, %c0_15], %28 {strides = array<i32>} : memref<8x4xf32, #tpu.memory_space<vmem>>, vector<8x4xf32>,
    %30 = vector.extract_strided_slice %12 {offsets = [0, 4], sizes = [8, 1], strides = [1, 1]} : vector<8x128xf32> to vector<8x1xf32>
    %c0_16 = arith.constant 0 : index
    %c0_17 = arith.constant 0 : index
    %31 = vector.load %arg7[%c0_16, %c0_17] : memref<8x1xf32, #tpu.memory_space<vmem>>, vector<8x1xf32>
    tpu.vector_store %arg7[%c0_16, %c0_17], %30 {strides = array<i32>} : memref<8x1xf32, #tpu.memory_space<vmem>>, vector<8x1xf32>,
    return
  }
  func.func @transform_0(%arg0: i32) -> (i32, i32) {
    %c0_i32 = arith.constant 0 : i32
    %c0_i32_0 = arith.constant 0 : i32
    return %arg0, %c0_i32 : i32, i32
  }
  func.func @transform_1(%arg0: i32) -> (i32, i32) {
    %c0_i32 = arith.constant 0 : i32
    %c0_i32_0 = arith.constant 0 : i32
    %c0_i32_1 = arith.constant 0 : i32
    return %c0_i32, %c0_i32_0 : i32, i32
  }
  func.func @transform_2(%arg0: i32) -> (i32, i32) {
    %c0_i32 = arith.constant 0 : i32
    %c0_i32_0 = arith.constant 0 : i32
    %c0_i32_1 = arith.constant 0 : i32
    return %c0_i32, %c0_i32_0 : i32, i32
  }
  func.func @transform_3(%arg0: i32) -> (i32, i32) {
    %c0_i32 = arith.constant 0 : i32
    %c0_i32_0 = arith.constant 0 : i32
    %c0_i32_1 = arith.constant 0 : i32
    return %c0_i32, %c0_i32_0 : i32, i32
  }
  func.func @transform_4(%arg0: i32) -> (i32, i32) {
    %c0_i32 = arith.constant 0 : i32
    %c0_i32_0 = arith.constant 0 : i32
    %c0_i32_1 = arith.constant 0 : i32
    return %c0_i32, %c0_i32_0 : i32, i32
  }
  func.func @transform_5(%arg0: i32) -> (i32, i32) {
    %c0_i32 = arith.constant 0 : i32
    %c0_i32_0 = arith.constant 0 : i32
    return %arg0, %c0_i32 : i32, i32
  }
  func.func @transform_6(%arg0: i32) -> (i32, i32) {
    %c0_i32 = arith.constant 0 : i32
    %c0_i32_0 = arith.constant 0 : i32
    return %arg0, %c0_i32 : i32, i32
  }
}

</mosaic_0001>

<llo_original>
// kernel: tpu_custom_call.1
$region0: #{tpu_custom_call.1}
  #allocation0 [shape = 'u32[]', space=smem, size = 0x4, offset = 0x4, fixed_abs, tag = 'smem constant byte address 0x4 - core index']
  #allocation1 [shape = 'u32[144,128]{1,0:T(1,128)}', space=vmem, size = 0x12000, scoped, tag = 'internal scratch']
  %s0 = inlined_call_operand.hbm [shape: f32[2,16], index: 0, kind: input, shape index: {}]
  %s1 = inlined_call_operand.hbm [shape: f32[16,128], index: 1, kind: input, shape index: {}]
  %s2 = inlined_call_operand.vmem [shape: f32[1,128], index: 2, kind: input, shape index: {}]
  %s3 = inlined_call_operand.hbm [shape: f32[128,128], index: 3, kind: input, shape index: {}]
  %s4 = inlined_call_operand.vmem [shape: f32[1,128], index: 4, kind: input, shape index: {}]
  %s5 = inlined_call_operand.hbm [shape: f32[2,4], index: 5, kind: output, shape index: {0}]
  %s6 = inlined_call_operand.vmem [shape: f32[2,1], index: 6, kind: output, shape index: {1}]
  %7 = xla_tuple %s5, %s6
  %s8 = sld [smem:[#allocation0]]
  $region80: #{tpu_custom_call.1} parent=0
    _
  %s10 = ssub.s32 1, %s8
  %s11 = scalar_select 0, %s10, %s8
  $region1: #{tpu_custom_call.1} parent=0
    #allocation2 [shape = 'u8[4096]{0}', space=vmem, size = 0x1000, scoped, tag = 'input window, operand 0, single buffered']
    #allocation3 [shape = 's32[1]{0}', space=sflag, size = 0x4, scoped, tag = 'scoped memory for tpu_custom_call.1']
    #allocation4 [shape = 's32[1]{0}', space=sflag, size = 0x4, scoped, tag = 'scoped memory for tpu_custom_call.1']
    #allocation5 [shape = 'u8[8192]{0}', space=vmem, size = 0x2000, scoped, tag = 'input window, operand 1, single buffered']
    #allocation6 [shape = 's32[1]{0}', space=sflag, size = 0x4, scoped, tag = 'scoped memory for tpu_custom_call.1']
    #allocation7 [shape = 'u8[65536]{0}', space=vmem, size = 0x10000, scoped, tag = 'input window, operand 3, single buffered']
    #allocation8 [shape = 'u8[4096]{0}', space=vmem, size = 0x1000, scoped, tag = 'output window, operand 0, single buffered']
    #allocation9 [shape = 'u8[4096]{0}', space=vmem, size = 0x1000, scoped, tag = 'output window, operand 1, single buffered']
    %12 = vsyncpa [#allocation3], 0
    %13 = vsyncpa [#allocation6], 0
    %14 = vsyncpa [#allocation4], 0
    // Predicated region
    $region2: #{tpu_custom_call.1} parent=1 // pred_check
      _
    $region3: #{tpu_custom_call.1} parent=1 // pred_check_branch
      %16 = sbr.rel (0) target = $region5
    $region4: #{tpu_custom_call.1} parent=1 // pred_region
      %s18 = ssub.s32 128, 32
      %19 = vsyncadd [#allocation3], %s18
      %s20 = sshll.u32 [#allocation2], 4
      %s21 = int_to_ptr.vmem [resolvable:$true] %s20
      %26 = dma.hbm_to_vmem [thread:$0]  %s0, 32, %s21, [#allocation3], 32, 32, 2
    $region5: #{tpu_custom_call.1} parent=1 // pred_fallthru
      _
    // Predicated region
    $region6: #{tpu_custom_call.1} parent=1 // pred_check
      _
    $region7: #{tpu_custom_call.1} parent=1 // pred_check_branch
      %28 = sbr.rel (0) target = $region9
    $region8: #{tpu_custom_call.1} parent=1 // pred_region
      %s30 = ssub.s32 256, 256
      %31 = vsyncadd [#allocation6], %s30
      %s32 = sshll.u32 [#allocation5], 4
      %s33 = int_to_ptr.vmem [resolvable:$true] %s32
      %38 = dma.hbm_to_vmem [thread:$0]  %s1, 256, %s33, [#allocation6], 128, 128, 8
    $region9: #{tpu_custom_call.1} parent=1 // pred_fallthru
      _
    // Predicated region
    $region10: #{tpu_custom_call.1} parent=1 // pred_check
      _
    $region11: #{tpu_custom_call.1} parent=1 // pred_check_branch
      %40 = sbr.rel (0) target = $region13
    $region12: #{tpu_custom_call.1} parent=1 // pred_region
      _
    $region13: #{tpu_custom_call.1} parent=1 // pred_fallthru
      _
    // Predicated region
    $region14: #{tpu_custom_call.1} parent=1 // pred_check
      _
    $region15: #{tpu_custom_call.1} parent=1 // pred_check_branch
      %42 = sbr.rel (0) target = $region17
    $region16: #{tpu_custom_call.1} parent=1 // pred_region
      %s44 = ssub.s32 2048, 2048
      %45 = vsyncadd [#allocation6], %s44
      %s46 = sshll.u32 [#allocation7], 4
      %s47 = int_to_ptr.vmem [resolvable:$true] %s46
      %52 = dma.hbm_to_vmem [thread:$0]  %s3, 2048, %s47, [#allocation6], 128, 128, 8
    $region17: #{tpu_custom_call.1} parent=1 // pred_fallthru
      _
    // Predicated region
    $region18: #{tpu_custom_call.1} parent=1 // pred_check
      _
    $region19: #{tpu_custom_call.1} parent=1 // pred_check_branch
      %54 = sbr.rel (0) target = $region21
    $region20: #{tpu_custom_call.1} parent=1 // pred_region
      _
    $region21: #{tpu_custom_call.1} parent=1 // pred_fallthru
      _
    // Predicated region
    $region22: #{tpu_custom_call.1} parent=1 // pred_check
      _
    $region23: #{tpu_custom_call.1} parent=1 // pred_check_branch
      %56 = sbr.rel (0) target = $region25
    $region24: #{tpu_custom_call.1} parent=1 // pred_region
      %57 = dma.done [#allocation3], 128
    $region25: #{tpu_custom_call.1} parent=1 // pred_fallthru
      _
    // Predicated region
    $region26: #{tpu_custom_call.1} parent=1 // pred_check
      _
    $region27: #{tpu_custom_call.1} parent=1 // pred_check_branch
      %59 = sbr.rel (0) target = $region29
    $region28: #{tpu_custom_call.1} parent=1 // pred_region
      %60 = dma.done [#allocation6], 256
    $region29: #{tpu_custom_call.1} parent=1 // pred_fallthru
      _
    // Predicated region
    $region30: #{tpu_custom_call.1} parent=1 // pred_check
      _
    $region31: #{tpu_custom_call.1} parent=1 // pred_check_branch
      %62 = sbr.rel (0) target = $region33
    $region32: #{tpu_custom_call.1} parent=1 // pred_region
      %63 = dma.done [#allocation6], 2048
    $region33: #{tpu_custom_call.1} parent=1 // pred_fallthru
      _
    %v64 = vld [vmem:[#allocation2] sm:$0xff]
    %v65 = vld [vmem:[#allocation5] sm:$0xff]
    %v66 = vld [vmem:[#allocation5 + $0x8] sm:$0xff]
    %v67 = vld [vmem:[%s2] sm:$0x1]
    %v69 = vlaneseq
    %v70 = vshrl.u32 %v69, 7
    %v71 = vsub.s32 0, %v70
    %v72 = vrot.slane %v67, %v71
    %vm74 = vcmask 130048
    %v76 = vsel %vm74, %v64, 0
    %78 = vmatprep.subr.mxu0 0.0
    %79 = vmatpush1.msra.mxu0 0.0
    %80 = vmatprep.subr.mxu0 0.0
    %81 = vmatpush1.msra.mxu0 0.0
    %82 = vmatprep.subr.mxu0 0.0
    %83 = vmatpush1.msra.mxu0 0.0
    %84 = vmatprep.subr.mxu0 0.0
    %85 = vmatpush1.msra.mxu0 0.0
    %86 = vmatprep.subr.mxu0 0.0
    %87 = vmatpush1.msra.mxu0 0.0
    %88 = vmatprep.subr.mxu0 0.0
    %89 = vmatpush1.msra.mxu0 0.0
    %90 = vmatprep.subr.mxu0 0.0
    %91 = vmatpush1.msra.mxu0 0.0
    %92 = vmatprep.subr.mxu0 0.0
    %93 = vmatpush1.msra.mxu0 0.0
    %94 = vmatprep.subr.mxu0 0.0
    %95 = vmatpush1.msra.mxu0 0.0
    %96 = vmatprep.subr.mxu0 0.0
    %97 = vmatpush1.msra.mxu0 0.0
    %98 = vmatprep.subr.mxu0 0.0
    %99 = vmatpush1.msra.mxu0 0.0
    %100 = vmatprep.subr.mxu0 0.0
    %101 = vmatpush1.msra.mxu0 0.0
    %102 = vmatprep.subr.mxu0 0.0
    %103 = vmatpush1.msra.mxu0 0.0
    %104 = vmatprep.subr.mxu0 0.0
    %105 = vmatpush1.msra.mxu0 0.0
    %106 = vmatprep.subr.mxu0 0.0
    %107 = vmatpush1.msra.mxu0 %v66
    %108 = vmatprep.subr.mxu0 0.0
    %109 = vmatpush1.msra.mxu0 %v65
    %110 = vmatprep.subr.mxu0 0.0
    %111 = vmatpush2.msra.mxu0 0.0
    %112 = vmatprep.subr.mxu0 0.0
    %113 = vmatpush2.msra.mxu0 0.0
    %114 = vmatprep.subr.mxu0 0.0
    %115 = vmatpush2.msra.mxu0 0.0
    %116 = vmatprep.subr.mxu0 0.0
    %117 = vmatpush2.msra.mxu0 0.0
    %118 = vmatprep.subr.mxu0 0.0
    %119 = vmatpush2.msra.mxu0 0.0
    %120 = vmatprep.subr.mxu0 0.0
    %121 = vmatpush2.msra.mxu0 0.0
    %122 = vmatprep.subr.mxu0 0.0
    %123 = vmatpush2.msra.mxu0 0.0
    %124 = vmatprep.subr.mxu0 0.0
    %125 = vmatpush2.msra.mxu0 0.0
    %126 = vmatprep.subr.mxu0 0.0
    %127 = vmatpush2.msra.mxu0 0.0
    %128 = vmatprep.subr.mxu0 0.0
    %129 = vmatpush2.msra.mxu0 0.0
    %130 = vmatprep.subr.mxu0 0.0
    %131 = vmatpush2.msra.mxu0 0.0
    %132 = vmatprep.subr.mxu0 0.0
    %133 = vmatpush2.msra.mxu0 0.0
    %134 = vmatprep.subr.mxu0 0.0
    %135 = vmatpush2.msra.mxu0 0.0
    %136 = vmatprep.subr.mxu0 0.0
    %137 = vmatpush2.msra.mxu0 0.0
    %138 = vmatprep.subr.mxu0 0.0
    %139 = vmatpush2.msra.mxu0 0.0
    %140 = vmatprep.subr.mxu0 0.0
    %141 = vmatpush2.msra.mxu0 0.0
    %142 = vmatprep.mubr.f32.mxu0 0.0
    %143 = vmatmul.mubr.f32.gmra.mxu0 %v76
    %v144 = vpop.f32.mrf.mxu0
    %v145 = vadd.f32 %v72, %v144
    %v146 = vpop.f32.mrf.mxu0
    %147 = vdwg.mxu0
    %v148 = vmax.f32 %v145, 0.0
    %v149 = vld [vmem:[#allocation7] sm:$0xff]
    %v150 = vld [vmem:[#allocation7 + $0x8] sm:$0xff]
    %v151 = vld [vmem:[#allocation7 + $0x10] sm:$0xff]
    %v152 = vld [vmem:[#allocation7 + $0x18] sm:$0xff]
    %v153 = vld [vmem:[#allocation7 + $0x20] sm:$0xff]
    %v154 = vld [vmem:[#allocation7 + $0x28] sm:$0xff]
    %v155 = vld [vmem:[#allocation7 + $0x30] sm:$0xff]
    %v156 = vld [vmem:[#allocation7 + $0x38] sm:$0xff]
    %v157 = vld [vmem:[#allocation7 + $0x40] sm:$0xff]
    %v158 = vld [vmem:[#allocation7 + $0x48] sm:$0xff]
    %v159 = vld [vmem:[#allocation7 + $0x50] sm:$0xff]
    %v160 = vld [vmem:[#allocation7 + $0x58] sm:$0xff]
    %v161 = vld [vmem:[#allocation7 + $0x60] sm:$0xff]
    %v162 = vld [vmem:[#allocation7 + $0x68] sm:$0xff]
    %v163 = vld [vmem:[#allocation7 + $0x70] sm:$0xff]
    %v164 = vld [vmem:[#allocation7 + $0x78] sm:$0xff]
    %v165 = vld [vmem:[%s4] sm:$0x1]
    %v167 = vlaneseq
    %v168 = vshrl.u32 %v167, 7
    %v169 = vsub.s32 0, %v168
    %v170 = vrot.slane %v165, %v169
    %172 = vmatprep.subr.mxu0 0.0
    %173 = vmatpush1.msra.mxu0 %v164
    %174 = vmatprep.subr.mxu0 0.0
    %175 = vmatpush1.msra.mxu0 %v163
    %176 = vmatprep.subr.mxu0 0.0
    %177 = vmatpush1.msra.mxu0 %v162
    %178 = vmatprep.subr.mxu0 0.0
    %179 = vmatpush1.msra.mxu0 %v161
    %180 = vmatprep.subr.mxu0 0.0
    %181 = vmatpush1.msra.mxu0 %v160
    %182 = vmatprep.subr.mxu0 0.0
    %183 = vmatpush1.msra.mxu0 %v159
    %184 = vmatprep.subr.mxu0 0.0
    %185 = vmatpush1.msra.mxu0 %v158
    %186 = vmatprep.subr.mxu0 0.0
    %187 = vmatpush1.msra.mxu0 %v157
    %188 = vmatprep.subr.mxu0 0.0
    %189 = vmatpush1.msra.mxu0 %v156
    %190 = vmatprep.subr.mxu0 0.0
    %191 = vmatpush1.msra.mxu0 %v155
    %192 = vmatprep.subr.mxu0 0.0
    %193 = vmatpush1.msra.mxu0 %v154
    %194 = vmatprep.subr.mxu0 0.0
    %195 = vmatpush1.msra.mxu0 %v153
    %196 = vmatprep.subr.mxu0 0.0
    %197 = vmatpush1.msra.mxu0 %v152
    %198 = vmatprep.subr.mxu0 0.0
    %199 = vmatpush1.msra.mxu0 %v151
    %200 = vmatprep.subr.mxu0 0.0
    %201 = vmatpush1.msra.mxu0 %v150
    %202 = vmatprep.subr.mxu0 0.0
    %203 = vmatpush1.msra.mxu0 %v149
    %204 = vmatprep.subr.mxu0 0.0
    %205 = vmatpush2.msra.mxu0 0.0
    %206 = vmatprep.subr.mxu0 0.0
    %207 = vmatpush2.msra.mxu0 0.0
    %208 = vmatprep.subr.mxu0 0.0
    %209 = vmatpush2.msra.mxu0 0.0
    %210 = vmatprep.subr.mxu0 0.0
    %211 = vmatpush2.msra.mxu0 0.0
    %212 = vmatprep.subr.mxu0 0.0
    %213 = vmatpush2.msra.mxu0 0.0
    %214 = vmatprep.subr.mxu0 0.0
    %215 = vmatpush2.msra.mxu0 0.0
    %216 = vmatprep.subr.mxu0 0.0
    %217 = vmatpush2.msra.mxu0 0.0
    %218 = vmatprep.subr.mxu0 0.0
    %219 = vmatpush2.msra.mxu0 0.0
    %220 = vmatprep.subr.mxu0 0.0
    %221 = vmatpush2.msra.mxu0 0.0
    %222 = vmatprep.subr.mxu0 0.0
    %223 = vmatpush2.msra.mxu0 0.0
    %224 = vmatprep.subr.mxu0 0.0
    %225 = vmatpush2.msra.mxu0 0.0
    %226 = vmatprep.subr.mxu0 0.0
    %227 = vmatpush2.msra.mxu0 0.0
    %228 = vmatprep.subr.mxu0 0.0
    %229 = vmatpush2.msra.mxu0 0.0
    %230 = vmatprep.subr.mxu0 0.0
    %231 = vmatpush2.msra.mxu0 0.0
    %232 = vmatprep.subr.mxu0 0.0
    %233 = vmatpush2.msra.mxu0 0.0
    %234 = vmatprep.subr.mxu0 0.0
    %235 = vmatpush2.msra.mxu0 0.0
    %236 = vmatprep.mubr.f32.mxu0 0.0
    %237 = vmatmul.mubr.f32.gmra.mxu0 %v148
    %v238 = vpop.f32.mrf.mxu0
    %v239 = vadd.f32 %v170, %v238
    %v240 = vpop.f32.mrf.mxu0
    %241 = vdwg.mxu0
    %v242 = vlaneseq
    %v243 = vand.u32 %v242, 127
    %vm244 = vcmp.lt.s32.totalorder %v243, 4
    %v245 = vsel %vm244, %v239, -1e+30
    %246 = vmax.xlane.f32.xlu0 %v245
    %v247 = vpop.xlane.xlu0 %246
    %v248 = vsub.f32 %v245, %v247
    %v249 = vmul.f32 %v248, 1.442695
    %v250 = vpow.pop %v249
    %251 = vadd.xlane.f32.xlu0 %v250
    %v252 = vpop.xlane.xlu0 %251
    %v253 = vrcp.pop %v252
    %v254 = vmul.f32 %v250, %v253
    %vm255 = vcmask 31744
    %256 = vst.msk [vmem:[#allocation8] sm:$0xff] %vm255, %v254
    %258 = vrot.lane.b32.xlu0 %v239, 124
    %v259 = vpop.permute.xlu0 %258
    %vm261 = vcmask 7168
    %262 = vst.msk [vmem:[#allocation9] sm:$0xff] %vm261, %v259
    // Predicated region
    $region34: #{tpu_custom_call.1} parent=1 // pred_check
      _
    $region35: #{tpu_custom_call.1} parent=1 // pred_check_branch
      %264 = sbr.rel (0) target = $region37
    $region36: #{tpu_custom_call.1} parent=1 // pred_region
      %s266 = ssub.s32 128, 32
      %267 = vsyncadd [#allocation4], %s266
      %s268 = sshll.u32 [#allocation8], 4
      %s269 = int_to_ptr.vmem [resolvable:$true] %s268
      %274 = dma.vmem_to_hbm [thread:$0]  %s269, 32, %s5, [#allocation4], 32, 32, 2
    $region37: #{tpu_custom_call.1} parent=1 // pred_fallthru
      _
    // Predicated region
    $region38: #{tpu_custom_call.1} parent=1 // pred_check
      _
    $region39: #{tpu_custom_call.1} parent=1 // pred_check_branch
      %276 = sbr.rel (0) target = $region41
    $region40: #{tpu_custom_call.1} parent=1 // pred_region
      // Predicated region
      $region42: #{tpu_custom_call.1} parent=40 // pred_check
        _
      $region43: #{tpu_custom_call.1} parent=40 // pred_check_branch
        %278 = sbr.rel (0) target = $region45
      $region44: #{tpu_custom_call.1} parent=40 // pred_region
        // Predicated region
        $region46: #{tpu_custom_call.1} parent=44 // pred_check
          _
        $region47: #{tpu_custom_call.1} parent=44 // pred_check_branch
          %280 = sbr.rel target = $region49
        $region48: #{tpu_custom_call.1} parent=44 // pred_region
          // Predicated region
          $region61: #{tpu_custom_call.1} parent=48 // pred_check
            _
          $region62: #{tpu_custom_call.1} parent=48 // pred_check_branch
            %296 = sbr.rel (0) target = $region64
          $region63: #{tpu_custom_call.1} parent=48 // pred_region
            %s298 = ssub.s32 4, 1
            loop: start=0, step=1, limit=1
            $region65: #{tpu_custom_call.1} parent=63 // loop_pre_header
              _
            $region66: #{tpu_custom_call.1} parent=63 // loop_header
              %s300 = sphi 0, %s304
              %p301 = scmp.ge.s32.totalorder %s300, 1
              %s305 = sphi [#allocation9], [#allocation9]
              %s306 = sphi %s6, %s6
            $region67: #{tpu_custom_call.1} parent=63 // loop_header_branch
              %303 = sbr.rel (%p301) target = $region71
            $region68: #{tpu_custom_call.1} parent=63 // loop_body
              %v307 = vld [vmem:[%s305] sm:%s298]
              %308 = vst [vmem:[%s306] sm:%s298] %v307
            $region69: #{tpu_custom_call.1} parent=63 // loop_footer
              %s304 = sadd.s32 1, %s300
            $region70: #{tpu_custom_call.1} parent=63 // loop_footer_branch
              %299 = sbr.rel target = $region66
            $region71: #{tpu_custom_call.1} parent=63 // loop_exit
              _
          $region64: #{tpu_custom_call.1} parent=48 // pred_fallthru
            _
        $region49: #{tpu_custom_call.1} parent=44 // pred_fallthru
          _
        // Predicated region
        $region50: #{tpu_custom_call.1} parent=44 // pred_check
          _
        $region51: #{tpu_custom_call.1} parent=44 // pred_check_branch
          %282 = sbr.rel (0) target = $region53
        $region52: #{tpu_custom_call.1} parent=44 // pred_region
          %s284 = ssub.s32 4, 1
          loop: start=0, step=1, limit=1
          $region54: #{tpu_custom_call.1} parent=52 // loop_pre_header
            _
          $region55: #{tpu_custom_call.1} parent=52 // loop_header
            %s286 = sphi 0, %s290
            %p287 = scmp.ge.s32.totalorder %s286, 1
            %s291 = sphi [#allocation9], [#allocation9]
            %s292 = sphi %s6, %s6
          $region56: #{tpu_custom_call.1} parent=52 // loop_header_branch
            %289 = sbr.rel (%p287) target = $region60
          $region57: #{tpu_custom_call.1} parent=52 // loop_body
            %v293 = vld [vmem:[%s291] sm:%s284]
            %294 = vst [vmem:[%s292] sm:%s284] %v293
          $region58: #{tpu_custom_call.1} parent=52 // loop_footer
            %s290 = sadd.s32 1, %s286
          $region59: #{tpu_custom_call.1} parent=52 // loop_footer_branch
            %285 = sbr.rel target = $region55
          $region60: #{tpu_custom_call.1} parent=52 // loop_exit
            _
        $region53: #{tpu_custom_call.1} parent=44 // pred_fallthru
          _
      $region45: #{tpu_custom_call.1} parent=40 // pred_fallthru
        _
      %309 = vnop
    $region41: #{tpu_custom_call.1} parent=1 // pred_fallthru
      _
    // Predicated region
    $region72: #{tpu_custom_call.1} parent=1 // pred_check
      _
    $region73: #{tpu_custom_call.1} parent=1 // pred_check_branch
      %311 = sbr.rel (0) target = $region75
    $region74: #{tpu_custom_call.1} parent=1 // pred_region
      %312 = dma.done [#allocation4], 128
    $region75: #{tpu_custom_call.1} parent=1 // pred_fallthru
      _
    // Predicated region
    $region76: #{tpu_custom_call.1} parent=1 // pred_check
      _
    $region77: #{tpu_custom_call.1} parent=1 // pred_check_branch
      %314 = sbr.rel (0) target = $region79
    $region78: #{tpu_custom_call.1} parent=1 // pred_region
      _
    $region79: #{tpu_custom_call.1} parent=1 // pred_fallthru
      _
    %315 = vsyncpa [#allocation3], 1
    %316 = vsyncpa [#allocation6], 1
    %317 = vsyncpa [#allocation4], 1

</llo_original>
